<compile_context>
chip_gen: v7x
topology: tpu7x:2x2x1
jax: 0.10.0
libtpu: 0.0.40
codegen_flags: <defaults>
</compile_context>

<pallas_src>
import functools

import numpy as np
import jax
import jax.numpy as jnp
from jax.experimental import pallas as pl
from jax.experimental.pallas import tpu as pltpu

_LANE = 128


def _round_up(x: int, m: int) -> int:
    return (x + m - 1) // m * m


@functools.lru_cache(maxsize=None)
def _frequency_constants(embedding_dim: int, padded_dim: int) -> jax.Array:
    """[2, Dp] f32: row 0 = 1/div_term, row 1 = phase (0 on even lanes, pi/2 on odd).

    Memoized on embedding_dim so repeated calls pay zero constant-building cost.
    Pad lanes (k >= embedding_dim) are computed but sliced off by the wrapper.
    """
    k = np.arange(padded_dim, dtype=np.float64)
    # PyTorch: div_term = 10000 ** (2*k // 2 / D)  (floor-div on float)
    exponent = np.floor(2.0 * k / 2.0) / float(embedding_dim)
    inv_div = (1.0 / np.power(10000.0, exponent)).astype(np.float32)
    phase = np.where((np.arange(padded_dim) % 2) == 1, np.pi / 2.0, 0.0).astype(np.float32)
    return jnp.asarray(np.stack([inv_div, phase], axis=0))  # [2, Dp]


def _sinusoidal_kernel(t_ref, const_ref, out_ref):
    # t_ref:     [TB, 1]  f32  timesteps for this batch tile
    # const_ref: [2,  Dp] f32  row 0 = 1/div_term, row 1 = phase offset
    # out_ref:   [TB, Dp] f32
    c = const_ref[...]
    # VPU broadcast mul + add, then a single EUP transcendental per element
    # (cos(x) == sin(x + pi/2), so no sin+cos+select and no in-kernel divide).
    arg = t_ref[...] * c[0:1, :] + c[1:2, :]
    out_ref[...] = jnp.sin(arg).astype(out_ref.dtype)


def sinusoidal_embedding(time_t: jax.Array, embedding_dim: int, *, block_batch: int = 2048) -> jax.Array:
    """time_t: [batch, 1] (or [batch]) -> [batch, embedding_dim] float32."""
    if embedding_dim % 2 != 0:
        raise ValueError("Embedding dimensions must be divisible by 2")
    D = int(embedding_dim)
    Dp = _round_up(D, _LANE)  # lane-dense output block (full 128-lane vst)

    t = time_t.astype(jnp.float32).reshape(-1, 1)
    B = t.shape[0]

    const = _frequency_constants(D, Dp)  # cached [2, Dp]

    # --- batch tile selection -------------------------------------------------
    # Double-buffered VMEM working set per grid step:
    #   output tile: tb * Dp * 4 * 2   +   time column (lane-padded to 128): tb * 128 * 4 * 2
    # Cap it around ~8 MiB so even v5e's 16 MiB scoped-VMEM default is safe.
    bytes_per_row = Dp * 4 * 2 + _LANE * 4 * 2
    vmem_cap_rows = max(8, ((8 << 20) // bytes_per_row) // 8 * 8)
    max_tb = min(block_batch, vmem_cap_rows)

    if B <= max_tb:
        if B >= 1024:
            # Split into >=2 grid steps so dimension_semantics=("parallel",)
            # actually shards across both v7x TensorCores.
            tb = _round_up(-(-B // 2), 8)
        else:
            # Single step; block equals full array extent so no (8,)-divisibility needed.
            tb = B
    else:
        tb = max_tb
    grid = (pl.cdiv(B, tb),)

    out = pl.pallas_call(
        _sinusoidal_kernel,
        out_shape=jax.ShapeDtypeStruct((B, Dp), jnp.float32),
        grid=grid,
        in_specs=[
            pl.BlockSpec((tb, 1), lambda i: (i, 0)),   # per-tile timesteps
            pl.BlockSpec((2, Dp), lambda i: (0, 0)),   # resident constants
        ],
        out_specs=pl.BlockSpec((tb, Dp), lambda i: (i, 0)),
        compiler_params=pltpu.CompilerParams(
            dimension_semantics=("parallel",),         # batch tiles are independent
        ),
        cost_estimate=pl.CostEstimate(
            flops=2 * B * Dp,
            transcendentals=B * Dp,
            bytes_accessed=B * Dp * 4 + B * 4 + 2 * Dp * 4,
        ),
    )(t, const)

    if Dp != D:
        out = out[:, :D]
    return out


def _reference(time_t, embedding_dim):
    # Pure-JAX mirror of the PyTorch forward (divide form) for validation.
    pos = jnp.arange(0, embedding_dim, dtype=jnp.float32)
    div_term = jnp.power(10000.0, jnp.floor(2.0 * pos / 2.0) / embedding_dim)
    arg = time_t.astype(jnp.float32).reshape(-1, 1) / div_term[None, :]
    even = (jnp.arange(embedding_dim) % 2) == 0
    return jnp.where(even[None, :], jnp.sin(arg), jnp.cos(arg)).astype(jnp.float32)


if __name__ == "__main__":
    key = jax.random.PRNGKey(0)
    batch = 8
    embedding_dim = 128
    # Diffusion-style integer timesteps, shape [batch, 1].
    time_t = jax.random.randint(key, (batch, 1), 0, 1000).astype(jnp.float32)

    out = jax.block_until_ready(sinusoidal_embedding(time_t, embedding_dim))
    ref = _reference(time_t, embedding_dim)

    assert out.shape == (batch, embedding_dim)
    assert out.dtype == jnp.float32
    # Tolerance note: multiplying by a precomputed 1/div_term and folding cos into
    # sin(arg + pi/2) perturbs the argument by a few ULPs; for t up to ~1000 that
    # moves sin/cos by at most ~3e-4 vs. the divide-based reference. Any real bug
    # (wrong frequency, swapped sin/cos, mis-tiled batch) gives O(1) error.
    max_err = float(jnp.max(jnp.abs(out - ref)))
    assert max_err < 1e-3, f"max abs error {max_err}"

    print("KERNEL_OK")
</pallas_src>

<mosaic_0001>
module attributes {stable_mosaic.version = 11 : i64} {
  func.func @_sinusoidal_kernel(%arg0: i32, %arg1: memref<8x1xf32, #tpu.memory_space<vmem>>, %arg2: memref<2x128xf32, #tpu.memory_space<vmem>>, %arg3: memref<8x128xf32, #tpu.memory_space<vmem>>) attributes {dimension_semantics = [#tpu.dimension_semantics<parallel>], iteration_bounds = array<i64: 1>, scalar_prefetch = 0 : i64, scratch_operands = 0 : i64, tpu.core_type = #tpu.core_type<tc>, window_params = [{transform_indices = @transform_0, window_bounds = array<i64: 8, 1>}, {pipeline_mode = #tpu.pipeline_mode<synchronous>, transform_indices = @transform_1, window_bounds = array<i64: 2, 128>}, {transform_indices = @transform_2, window_bounds = array<i64: 8, 128>}]} {
    %c0 = arith.constant 0 : index
    %c0_0 = arith.constant 0 : index
    %0 = vector.load %arg2[%c0, %c0_0] : memref<2x128xf32, #tpu.memory_space<vmem>>, vector<2x128xf32>
    %c0_1 = arith.constant 0 : index
    %c0_2 = arith.constant 0 : index
    %1 = vector.load %arg1[%c0_1, %c0_2] : memref<8x1xf32, #tpu.memory_space<vmem>>, vector<8x1xf32>
    %2 = vector.extract_strided_slice %0 {offsets = [0, 0], sizes = [1, 128], strides = [1, 1]} : vector<2x128xf32> to vector<1x128xf32>
    %3 = vector.broadcast %1 : vector<8x1xf32> to vector<8x128xf32>
    %4 = vector.broadcast %2 : vector<1x128xf32> to vector<8x128xf32>
    %5 = arith.mulf %3, %4 : vector<8x128xf32>
    %6 = vector.extract_strided_slice %0 {offsets = [1, 0], sizes = [1, 128], strides = [1, 1]} : vector<2x128xf32> to vector<1x128xf32>
    %7 = vector.broadcast %6 : vector<1x128xf32> to vector<8x128xf32>
    %8 = arith.addf %5, %7 : vector<8x128xf32>
    %9 = math.sin %8 : vector<8x128xf32>
    %c0_3 = arith.constant 0 : index
    %c0_4 = arith.constant 0 : index
    %10 = vector.load %arg3[%c0_3, %c0_4] : memref<8x128xf32, #tpu.memory_space<vmem>>, vector<8x128xf32>
    tpu.vector_store %arg3[%c0_3, %c0_4], %9 {strides = array<i32>} : memref<8x128xf32, #tpu.memory_space<vmem>>, vector<8x128xf32>,
    return
  }
  func.func @transform_0(%arg0: i32) -> (i32, i32) {
    %c0_i32 = arith.constant 0 : i32
    %c0_i32_0 = arith.constant 0 : i32
    return %arg0, %c0_i32 : i32, i32
  }
  func.func @transform_1(%arg0: i32) -> (i32, i32) {
    %c0_i32 = arith.constant 0 : i32
    %c0_i32_0 = arith.constant 0 : i32
    %c0_i32_1 = arith.constant 0 : i32
    return %c0_i32, %c0_i32_0 : i32, i32
  }
  func.func @transform_2(%arg0: i32) -> (i32, i32) {
    %c0_i32 = arith.constant 0 : i32
    %c0_i32_0 = arith.constant 0 : i32
    return %arg0, %c0_i32 : i32, i32
  }
}

</mosaic_0001>

<llo_original>
// kernel: tpu_custom_call.1
$region0: #{tpu_custom_call.1}
  #allocation0 [shape = 'u32[]', space=smem, size = 0x4, offset = 0x4, fixed_abs, tag = 'smem constant byte address 0x4 - core index']
  #allocation1 [shape = 'u32[144,128]{1,0:T(1,128)}', space=vmem, size = 0x12000, scoped, tag = 'internal scratch']
  %s0 = inlined_call_operand.vmem [shape: f32[8,1], index: 0, kind: input, shape index: {}]
  %s1 = inlined_call_operand.vmem [shape: f32[2,128], index: 1, kind: input, shape index: {}]
  %s2 = inlined_call_operand.hbm [shape: f32[8,128], index: 2, kind: output, shape index: {}]
  %s3 = sld [smem:[#allocation0]]
  $region18: #{tpu_custom_call.1} parent=0
    _
  %s5 = ssub.s32 1, %s3
  %s6 = scalar_select 0, %s5, %s3
  $region1: #{tpu_custom_call.1} parent=0
    #allocation2 [shape = 'u8[4096]{0}', space=vmem, size = 0x1000, scoped, tag = 'output window, operand 0, single buffered']
    #allocation3 [shape = 's32[1]{0}', space=sflag, size = 0x4, scoped, tag = 'scoped memory for tpu_custom_call.1']
    %7 = vsyncpa [#allocation3], 0
    // Predicated region
    $region2: #{tpu_custom_call.1} parent=1 // pred_check
      _
    $region3: #{tpu_custom_call.1} parent=1 // pred_check_branch
      %9 = sbr.rel (0) target = $region5
    $region4: #{tpu_custom_call.1} parent=1 // pred_region
      _
    $region5: #{tpu_custom_call.1} parent=1 // pred_fallthru
      _
    // Predicated region
    $region6: #{tpu_custom_call.1} parent=1 // pred_check
      _
    $region7: #{tpu_custom_call.1} parent=1 // pred_check_branch
      %11 = sbr.rel (0) target = $region9
    $region8: #{tpu_custom_call.1} parent=1 // pred_region
      _
    $region9: #{tpu_custom_call.1} parent=1 // pred_fallthru
      _
    %v12 = vld [vmem:[%s1] sm:$0x3]
    %v13 = vld [vmem:[%s0] sm:$0xff]
    %15 = vset.pattern.permute.xlu0 0
    %16 = vperm.xlu0 %15, %v13
    %v17 = vpop.permute.xlu0 %16
    %v19 = vlaneseq
    %v20 = vshrl.u32 %v19, 7
    %v21 = vsub.s32 0, %v20
    %v22 = vrot.slane %v12, %v21
    %v23 = vmul.f32 %v17, %v22
    %v24 = vlaneseq
    %v25 = vshrl.u32 %v24, 7
    %v26 = vsub.s32 1, %v25
    %v27 = vrot.slane %v12, %v26
    %v28 = vadd.f32 %v23, %v27
    %v29 = vand.u32 2147483647, %v28
    %vm30 = vcmp.le.f32.partialorder %v29, 0.7853982
    %vm31 = vcmp.lt.s32.totalorder %v28, 0
    %v32 = vand.u32 %v28, 2139095040
    %v33 = vshrl.u32 %v32, 23
    %v34 = vsub.s32 %v33, 127
    %v35 = vand.u32 2147483647, %v28
    %v36 = vand.u32 %v35, 8388607
    %v37 = vor.u32 %v36, 8388608
    %v38 = vsub.s32 0, %v37
    %v39 = vadd.s32 %v34, 1
    %vm40 = vcmp.gt.s32.totalorder %v39, 0
    %v41 = vsel %vm40, %v39, 0
    %v42 = vshrl.u32 %v41, 5
    %v43 = vand.u32 %v41, 31
    %v44 = vsub.s32 32, %v43
    %v45 = vshrl.u32 683565275, %v44
    %v46 = vshll.u32 683565275, %v43
    %v47 = vshrl.u32 2475754826, %v44
    %v48 = vor.u32 %v46, %v47
    %v49 = vshll.u32 2475754826, %v43
    %v50 = vshrl.u32 2131351028, %v44
    %v51 = vor.u32 %v49, %v50
    %v52 = vshll.u32 2131351028, %v43
    %v53 = vshrl.u32 2102212464, %v44
    %v54 = vor.u32 %v52, %v53
    %v55 = vshll.u32 2102212464, %v43
    %v56 = vshrl.u32 920167782, %v44
    %v57 = vor.u32 %v55, %v56
    %v58 = vshll.u32 920167782, %v43
    %v59 = vshrl.u32 1326507024, %v44
    %v60 = vor.u32 %v58, %v59
    %vm61 = vcmp.lt.s32.totalorder %v42, 1
    %vm62 = vcmp.lt.s32.totalorder %v42, 2
    %vm63 = vcmp.lt.s32.totalorder %v42, 3
    %vm64 = vcmp.lt.s32.totalorder %v42, 4
    %v65 = vsel %vm61, %v45, %v48
    %v66 = vsel %vm64, %v54, 2102212464
    %v67 = vsel %vm63, %v51, %v66
    %v68 = vsel %vm62, %v65, %v67
    %v69 = vsel %vm61, %v48, %v51
    %v70 = vsel %vm64, %v57, 920167782
    %v71 = vsel %vm63, %v54, %v70
    %v72 = vsel %vm62, %v69, %v71
    %v73 = vsel %vm61, %v51, %v54
    %v74 = vsel %vm64, %v60, 1326507024
    %v75 = vsel %vm63, %v57, %v74
    %v76 = vsel %vm62, %v73, %v75
    %v77 = vshll.u32 %v37, 8
    %v78 = vmul.u32.u64.compose %v77, %v76
    %v79 = vextract.low.u32 %v78
    %v80 = vextract.high.u32 %v78
    %v81 = vmul.u32.u64.compose %v77, %v72
    %v82 = vextract.low.u32 %v81
    %v83 = vextract.high.u32 %v81
    %v84 = vmul.u32 %v77, %v68
    %v85 = vadd.s32 %v80, %v82
    %vm86 = vc.u32 %v80, %v82
    %v87 = vadd.s32 %v83, 1
    %v88 = vsel %vm86, %v87, %v83
    %v89 = vadd.s32 %v84, %v88
    %v90 = vadd.s32 %v89, 536870912
    %v91 = vshrl.u32 %v90, 30
    %v92 = vshll.u32 %v91, 30
    %v93 = vsub.s32 %v89, %v92
    %vm94 = vcmp.lt.s32.totalorder %v93, 0
    %v95 = vsub.s32 0, %v93
    %v96 = vsel %vm94, %v95, %v93
    %v97 = vclz %v96
    %v98 = vsub.s32 %v97, 2
    %vm99 = vcmp.gt.s32.totalorder 0, %v98
    %v100 = vsel %vm99, 0, %v98
    %v101 = vsub.s32 32, %v100
    %v102 = vshll.u32 %v93, %v100
    %v103 = vshrl.u32 %v85, %v101
    %v104 = vor.u32 %v102, %v103
    %v105 = vsub.s32 4294967266, %v100
    %v106 = vadd.s32 %v105, 127
    %v107 = vshll.u32 %v106, 23
    %v108 = vor.u32 4788187, %v107
    %v109 = vand.u32 2147483647, %v108
    %v111 = vcvt.s32.f32 %v104
    %v112 = vmul.f32 %v111, %v109
    %v113 = vxor.u32 %v112, 2147483648
    %v114 = vsel %vm31, %v113, %v112
    %v115 = vsub.s32 4, %v91
    %v116 = vsel %vm31, %v115, %v91
    %v117 = vsel %vm30, %v28, %v114
    %v118 = vsel %vm30, 0, %v116
    %v119 = vcosq.f32.pop %v117
    %v120 = vsinq.f32.pop %v117
    %vm121 = vweird.f32 %v28
    %v122 = vadd.s32 %v118, 3
    %v123 = vand.u32 %v122, 3
    %vm124 = vcmp.lt.s32.totalorder %v123, 2
    %vm125 = vcmp.eq.s32.totalorder %v123, 0
    %v126 = vxor.u32 %v120, 2147483648
    %v127 = vsel %vm125, %v119, %v126
    %vm128 = vcmp.eq.s32.totalorder %v123, 2
    %v129 = vxor.u32 %v119, 2147483648
    %v130 = vsel %vm128, %v129, %v120
    %v131 = vsel %vm124, %v127, %v130
    %v132 = vsel %vm121, nan, %v131
    %133 = vst [vmem:[#allocation2] sm:$0xff] %v132
    // Predicated region
    $region10: #{tpu_custom_call.1} parent=1 // pred_check
      _
    $region11: #{tpu_custom_call.1} parent=1 // pred_check_branch
      %135 = sbr.rel (0) target = $region13
    $region12: #{tpu_custom_call.1} parent=1 // pred_region
      %s137 = ssub.s32 128, 128
      %138 = vsyncadd [#allocation3], %s137
      %s140 = sshll.u32 [#allocation2], 4
      %s141 = int_to_ptr.vmem [resolvable:$true] %s140
      %143 = dma.vmem_to_hbm [thread:$0]  %s141, 128, %s2, [#allocation3]
    $region13: #{tpu_custom_call.1} parent=1 // pred_fallthru
      _
    // Predicated region
    $region14: #{tpu_custom_call.1} parent=1 // pred_check
      _
    $region15: #{tpu_custom_call.1} parent=1 // pred_check_branch
      %145 = sbr.rel (0) target = $region17
    $region16: #{tpu_custom_call.1} parent=1 // pred_region
      %146 = dma.done [#allocation3], 128
    $region17: #{tpu_custom_call.1} parent=1 // pred_fallthru
      _
    %147 = vsyncpa [#allocation3], 1

</llo_original>
